<compile_context>
chip_gen: v6e
topology: v6e:2x2x1
jax: 0.10.0
libtpu: 0.0.40
codegen_flags: <defaults>
</compile_context>

<pallas_src>
import functools

import jax
import jax.numpy as jnp
from jax.experimental import pallas as pl
from jax.experimental.pallas import tpu as pltpu


def _round_up(x, m):
    return ((x + m - 1) // m) * m


def _vmem_capacity_bytes():
    """Per-core VMEM capacity; conservative fallback if the query fails."""
    try:
        return int(pltpu.get_tpu_info().vmem_capacity_bytes)
    except Exception:
        return 64 * 1024 * 1024  # v7x per-TC capacity (smallest across gens)


def _pick_row_tile(rows, tm_cap):
    """Pick (tile, rows_padded, grid).

    Prefers a tile that divides `rows` exactly (post-call row slice becomes a
    pure metadata op); otherwise falls back to zero row-padding."""
    rows8 = _round_up(max(rows, 1), 8)
    cap = max(8, min(tm_cap, rows8))
    cap -= cap % 8
    if rows % 8 == 0:
        t = cap
        while t >= max(8, cap // 2):
            if rows % t == 0:
                return t, rows, rows // t
            t -= 8
    grid_m = pl.cdiv(rows, cap)
    return cap, grid_m * cap, grid_m


def _mlp_kernel(x_ref, w1_ref, b1_ref, w2_ref, b2_ref, w3_ref, b3_ref, o_ref):
    cd = w1_ref.dtype  # MXU input dtype (bf16 by default, f32 if requested)
    # x arrives in f32; cast to the MXU dtype in-kernel (VPU has slack).
    x = x_ref[...].astype(cd)
    # Layer 1: Linear + ReLU (f32 accumulation, f32 bias/ReLU on the VPU).
    h = jnp.dot(x, w1_ref[...], preferred_element_type=jnp.float32)
    h = jnp.maximum(h + b1_ref[...], 0.0)
    # Layer 2: Linear + ReLU
    h = jnp.dot(h.astype(cd), w2_ref[...], preferred_element_type=jnp.float32)
    h = jnp.maximum(h + b2_ref[...], 0.0)
    # Layer 3: Linear + ReLU
    h = jnp.dot(h.astype(cd), w3_ref[...], preferred_element_type=jnp.float32)
    h = jnp.maximum(h + b3_ref[...], 0.0)
    o_ref[...] = h.astype(o_ref.dtype)


@functools.partial(jax.jit, static_argnames=("tm", "compute_dtype", "out_dtype"))
def particle_encoder_forward(x, params, *, tm=512,
                             compute_dtype=jnp.bfloat16, out_dtype=None):
    """x: [B, N, D] float32 -> [B, N, output_dim] (out_dtype, default x.dtype)."""
    w1, b1, w2, b2, w3, b3 = params
    B, N, D = x.shape
    H = w1.shape[1]
    out_dim = w3.shape[1]
    # NOTE: the PyTorch module reshapes the output back to [B, N, D], which
    # only works when out_dim == D; reshaping to out_dim is identical there.

    rows = B * N

    cdt = jnp.dtype(compute_dtype)
    odt = jnp.dtype(out_dtype) if out_dtype is not None else x.dtype
    c_item = cdt.itemsize
    o_item = odt.itemsize

    # Lane padding multiple: 128 for the mem-bound small-H case, 256 once the
    # kernel is plausibly compute-bound (fills the 256-wide v6e/v7x MXU).
    lane = 256 if H >= 512 else 128
    Dp = _round_up(D, lane)
    Hp = _round_up(H, lane)
    Op = _round_up(out_dim, lane)

    # Weights are single-buffered residents -> 1x footprint; biases are f32.
    weight_bytes = (Dp * Hp + Hp * Hp + Hp * Op) * c_item + (2 * Hp + Op) * 4
    # Per-row VMEM: double-buffered f32 x tile + double-buffered out tile +
    # f32 intermediates and casted copies (generous estimate).
    per_row = (2 * Dp * 4) + (2 * Op * o_item) + (
        Hp * 4 + Hp * c_item + Dp * c_item + Op * 4)

    vmem_budget = int(_vmem_capacity_bytes() * 0.75)  # headroom for Mosaic scratch

    # TODO(synk): for very large hidden dims (weights alone > ~half the VMEM
    # budget) a K-tiled path with an f32 accumulator scratch would be needed;
    # here we only shrink the row tile.
    tm_cap = max(8, min(tm, _round_up(rows, 8)))
    tm_cap -= tm_cap % 8
    while tm_cap > 8 and weight_bytes + per_row * tm_cap > vmem_budget:
        tm_cap = max(8, (tm_cap // 2) - ((tm_cap // 2) % 8))

    tm_eff, rows_p, grid_m = _pick_row_tile(rows, tm_cap)

    # v7x has 2 TensorCores: give the "parallel" grid axis at least 2 steps.
    if grid_m == 1 and tm_eff >= 16 and tm_eff % 16 == 0:
        tm_eff //= 2
        grid_m = 2

    # x stays float32 (cast happens in-kernel); only pad when actually needed
    # so this is a no-op for 128-aligned shapes.
    x2 = x.reshape(rows, D)
    if rows_p != rows or Dp != D:
        x2 = jnp.pad(x2, ((0, rows_p - rows), (0, Dp - D)))

    def padw(a, r, c, dt):
        a = a.astype(dt)
        if a.shape != (r, c):
            a = jnp.pad(a, ((0, r - a.shape[0]), (0, c - a.shape[1])))
        return a

    # Weights feed the MXU in compute_dtype; biases stay f32 (VPU path).
    w1p = padw(w1, Dp, Hp, cdt)
    w2p = padw(w2, Hp, Hp, cdt)
    w3p = padw(w3, Hp, Op, cdt)
    b1p = padw(b1, 1, Hp, jnp.float32)
    b2p = padw(b2, 1, Hp, jnp.float32)
    b3p = padw(b3, 1, Op, jnp.float32)

    flops = 2 * rows_p * (Dp * Hp + Hp * Hp + Hp * Op)
    bytes_accessed = (rows_p * Dp * x.dtype.itemsize
                      + weight_bytes
                      + rows_p * Op * o_item)

    vmem_est = weight_bytes + per_row * tm_eff
    vmem_limit = int(min(max(2 * vmem_est, 32 * 1024 * 1024), vmem_budget))

    resident = dict(pipeline_mode=pl.Buffered(1))  # single-buffered weights

    out = pl.pallas_call(
        _mlp_kernel,
        out_shape=jax.ShapeDtypeStruct((rows_p, Op), odt),
        grid_spec=pltpu.PrefetchScalarGridSpec(
            num_scalar_prefetch=0,
            grid=(grid_m,),
            in_specs=[
                # x row tile (default double-buffered; bump to pl.Buffered(3)
                # only if a profile shows exposed DMA waits at large tm).
                pl.BlockSpec((tm_eff, Dp), lambda i: (i, 0)),
                pl.BlockSpec((Dp, Hp), lambda i: (0, 0), **resident),  # W1
                pl.BlockSpec((1, Hp), lambda i: (0, 0), **resident),   # b1
                pl.BlockSpec((Hp, Hp), lambda i: (0, 0), **resident),  # W2
                pl.BlockSpec((1, Hp), lambda i: (0, 0), **resident),   # b2
                pl.BlockSpec((Hp, Op), lambda i: (0, 0), **resident),  # W3
                pl.BlockSpec((1, Op), lambda i: (0, 0), **resident),   # b3
            ],
            out_specs=pl.BlockSpec((tm_eff, Op), lambda i: (i, 0)),
        ),
        compiler_params=pltpu.CompilerParams(
            dimension_semantics=("parallel",),
            vmem_limit_bytes=vmem_limit,
        ),
        cost_estimate=pl.CostEstimate(
            flops=flops, transcendentals=0, bytes_accessed=bytes_accessed),
    )(x2, w1p, b1p, w2p, b2p, w3p, b3p)

    # Drop row/lane padding (identity when shapes already aligned) and restore
    # the [B, N, out] shape.
    if rows_p != rows or Op != out_dim:
        out = out[:rows, :out_dim]
    return out.reshape(B, N, out_dim)


def init_params(key, input_dim, output_dim, hidden_dim):
    """PyTorch-style uniform(-1/sqrt(fan_in), 1/sqrt(fan_in)) init.

    Weights stored as [in_features, out_features]; biases as (1, out)."""
    keys = jax.random.split(key, 6)

    def lin(kw, kb, fan_in, fan_out):
        bound = 1.0 / jnp.sqrt(fan_in)
        w = jax.random.uniform(kw, (fan_in, fan_out), jnp.float32, -bound, bound)
        b = jax.random.uniform(kb, (1, fan_out), jnp.float32, -bound, bound)
        return w, b

    w1, b1 = lin(keys[0], keys[1], input_dim, hidden_dim)
    w2, b2 = lin(keys[2], keys[3], hidden_dim, hidden_dim)
    w3, b3 = lin(keys[4], keys[5], hidden_dim, output_dim)
    return (w1, b1, w2, b2, w3, b3)


def _reference(x, params):
    w1, b1, w2, b2, w3, b3 = params
    B, N, D = x.shape
    h = x.reshape(B * N, D)
    h = jnp.maximum(h @ w1 + b1, 0.0)
    h = jnp.maximum(h @ w2 + b2, 0.0)
    h = jnp.maximum(h @ w3 + b3, 0.0)
    return h.reshape(B, N, -1)


if __name__ == "__main__":
    # Docstring says input is [B, N, N] -> D == N; reference reshape requires
    # output_dim == input_dim.
    B, N = 2, 16
    input_dim = N          # 16
    output_dim = N         # 16
    hidden_dim = 32

    key = jax.random.PRNGKey(0)
    kx, kp = jax.random.split(key)
    x = jax.random.normal(kx, (B, N, input_dim), jnp.float32)
    params = init_params(kp, input_dim, output_dim, hidden_dim)

    ref = _reference(x, params)

    # Exact-precision path (f32 MXU inputs, f32 output): tight check.
    out_f32 = particle_encoder_forward(x, params, compute_dtype=jnp.float32)
    out_f32 = jax.block_until_ready(out_f32)
    assert out_f32.shape == (B, N, output_dim)
    assert jnp.allclose(out_f32, ref, atol=1e-5, rtol=1e-5)

    # Fast path (bf16 MXU inputs, f32 accumulate, bf16 output): loose check.
    out_bf16 = particle_encoder_forward(x, params, compute_dtype=jnp.bfloat16,
                                        out_dtype=jnp.bfloat16)
    out_bf16 = jax.block_until_ready(out_bf16)
    assert out_bf16.shape == (B, N, output_dim)
    assert out_bf16.dtype == jnp.bfloat16
    assert jnp.allclose(out_bf16.astype(jnp.float32), ref, atol=1e-1, rtol=1e-1)

    print("KERNEL_OK")
</pallas_src>

<mosaic_0001>
module attributes {stable_mosaic.version = 11 : i64} {
  func.func @_mlp_kernel(%arg0: i32, %arg1: memref<16x128xf32, #tpu.memory_space<vmem>>, %arg2: memref<128x128xf32, #tpu.memory_space<vmem>>, %arg3: memref<1x128xf32, #tpu.memory_space<vmem>>, %arg4: memref<128x128xf32, #tpu.memory_space<vmem>>, %arg5: memref<1x128xf32, #tpu.memory_space<vmem>>, %arg6: memref<128x128xf32, #tpu.memory_space<vmem>>, %arg7: memref<1x128xf32, #tpu.memory_space<vmem>>, %arg8: memref<16x128xf32, #tpu.memory_space<vmem>>) attributes {dimension_semantics = [#tpu.dimension_semantics<parallel>], iteration_bounds = array<i64: 2>, scalar_prefetch = 0 : i64, scratch_operands = 0 : i64, tpu.core_type = #tpu.core_type<tc>, window_params = [{transform_indices = @transform_0, window_bounds = array<i64: 16, 128>}, {pipeline_mode = #tpu.pipeline_mode<synchronous>, transform_indices = @transform_1, window_bounds = array<i64: 128, 128>}, {pipeline_mode = #tpu.pipeline_mode<synchronous>, transform_indices = @transform_2, window_bounds = array<i64: 1, 128>}, {pipeline_mode = #tpu.pipeline_mode<synchronous>, transform_indices = @transform_3, window_bounds = array<i64: 128, 128>}, {pipeline_mode = #tpu.pipeline_mode<synchronous>, transform_indices = @transform_4, window_bounds = array<i64: 1, 128>}, {pipeline_mode = #tpu.pipeline_mode<synchronous>, transform_indices = @transform_5, window_bounds = array<i64: 128, 128>}, {pipeline_mode = #tpu.pipeline_mode<synchronous>, transform_indices = @transform_6, window_bounds = array<i64: 1, 128>}, {transform_indices = @transform_7, window_bounds = array<i64: 16, 128>}]} {
    %c0 = arith.constant 0 : index
    %c0_0 = arith.constant 0 : index
    %0 = vector.load %arg1[%c0, %c0_0] : memref<16x128xf32, #tpu.memory_space<vmem>>, vector<16x128xf32>
    %c0_1 = arith.constant 0 : index
    %c0_2 = arith.constant 0 : index
    %1 = vector.load %arg2[%c0_1, %c0_2] : memref<128x128xf32, #tpu.memory_space<vmem>>, vector<128x128xf32>
    %cst = arith.constant dense<0.000000e+00> : vector<16x128xf32>
    %2 = tpu.matmul %0, %1, %cst {dimension_numbers = #tpu.dot_dimension_numbers<[1], [0], [0], [1], [0, 0, 1, 1], [], []>} : vector<16x128xf32>, vector<128x128xf32>, vector<16x128xf32> -> vector<16x128xf32>
    %c0_3 = arith.constant 0 : index
    %c0_4 = arith.constant 0 : index
    %3 = vector.load %arg3[%c0_3, %c0_4] : memref<1x128xf32, #tpu.memory_space<vmem>>, vector<1x128xf32>
    %4 = vector.broadcast %3 : vector<1x128xf32> to vector<16x128xf32>
    %5 = arith.addf %2, %4 : vector<16x128xf32>
    %cst_5 = arith.constant 0.000000e+00 : f32
    %6 = vector.broadcast %cst_5 : f32 to vector<16x128xf32>
    %7 = arith.maximumf %5, %6 : vector<16x128xf32>
    %c0_6 = arith.constant 0 : index
    %c0_7 = arith.constant 0 : index
    %8 = vector.load %arg4[%c0_6, %c0_7] : memref<128x128xf32, #tpu.memory_space<vmem>>, vector<128x128xf32>
    %cst_8 = arith.constant dense<0.000000e+00> : vector<16x128xf32>
    %9 = tpu.matmul %7, %8, %cst_8 {dimension_numbers = #tpu.dot_dimension_numbers<[1], [0], [0], [1], [0, 0, 1, 1], [], []>} : vector<16x128xf32>, vector<128x128xf32>, vector<16x128xf32> -> vector<16x128xf32>
    %c0_9 = arith.constant 0 : index
    %c0_10 = arith.constant 0 : index
    %10 = vector.load %arg5[%c0_9, %c0_10] : memref<1x128xf32, #tpu.memory_space<vmem>>, vector<1x128xf32>
    %11 = vector.broadcast %10 : vector<1x128xf32> to vector<16x128xf32>
    %12 = arith.addf %9, %11 : vector<16x128xf32>
    %cst_11 = arith.constant 0.000000e+00 : f32
    %13 = vector.broadcast %cst_11 : f32 to vector<16x128xf32>
    %14 = arith.maximumf %12, %13 : vector<16x128xf32>
    %c0_12 = arith.constant 0 : index
    %c0_13 = arith.constant 0 : index
    %15 = vector.load %arg6[%c0_12, %c0_13] : memref<128x128xf32, #tpu.memory_space<vmem>>, vector<128x128xf32>
    %cst_14 = arith.constant dense<0.000000e+00> : vector<16x128xf32>
    %16 = tpu.matmul %14, %15, %cst_14 {dimension_numbers = #tpu.dot_dimension_numbers<[1], [0], [0], [1], [0, 0, 1, 1], [], []>} : vector<16x128xf32>, vector<128x128xf32>, vector<16x128xf32> -> vector<16x128xf32>
    %c0_15 = arith.constant 0 : index
    %c0_16 = arith.constant 0 : index
    %17 = vector.load %arg7[%c0_15, %c0_16] : memref<1x128xf32, #tpu.memory_space<vmem>>, vector<1x128xf32>
    %18 = vector.broadcast %17 : vector<1x128xf32> to vector<16x128xf32>
    %19 = arith.addf %16, %18 : vector<16x128xf32>
    %cst_17 = arith.constant 0.000000e+00 : f32
    %20 = vector.broadcast %cst_17 : f32 to vector<16x128xf32>
    %21 = arith.maximumf %19, %20 : vector<16x128xf32>
    %c0_18 = arith.constant 0 : index
    %c0_19 = arith.constant 0 : index
    %22 = vector.load %arg8[%c0_18, %c0_19] : memref<16x128xf32, #tpu.memory_space<vmem>>, vector<16x128xf32>
    tpu.vector_store %arg8[%c0_18, %c0_19], %21 {strides = array<i32>} : memref<16x128xf32, #tpu.memory_space<vmem>>, vector<16x128xf32>,
    return
  }
  func.func @transform_0(%arg0: i32) -> (i32, i32) {
    %c0_i32 = arith.constant 0 : i32
    %c0_i32_0 = arith.constant 0 : i32
    return %arg0, %c0_i32 : i32, i32
  }
  func.func @transform_1(%arg0: i32) -> (i32, i32) {
    %c0_i32 = arith.constant 0 : i32
    %c0_i32_0 = arith.constant 0 : i32
    %c0_i32_1 = arith.constant 0 : i32
    return %c0_i32, %c0_i32_0 : i32, i32
  }
  func.func @transform_2(%arg0: i32) -> (i32, i32) {
    %c0_i32 = arith.constant 0 : i32
    %c0_i32_0 = arith.constant 0 : i32
    %c0_i32_1 = arith.constant 0 : i32
    return %c0_i32, %c0_i32_0 : i32, i32
  }
  func.func @transform_3(%arg0: i32) -> (i32, i32) {
    %c0_i32 = arith.constant 0 : i32
    %c0_i32_0 = arith.constant 0 : i32
    %c0_i32_1 = arith.constant 0 : i32
    return %c0_i32, %c0_i32_0 : i32, i32
  }
  func.func @transform_4(%arg0: i32) -> (i32, i32) {
    %c0_i32 = arith.constant 0 : i32
    %c0_i32_0 = arith.constant 0 : i32
    %c0_i32_1 = arith.constant 0 : i32
    return %c0_i32, %c0_i32_0 : i32, i32
  }
  func.func @transform_5(%arg0: i32) -> (i32, i32) {
    %c0_i32 = arith.constant 0 : i32
    %c0_i32_0 = arith.constant 0 : i32
    %c0_i32_1 = arith.constant 0 : i32
    return %c0_i32, %c0_i32_0 : i32, i32
  }
  func.func @transform_6(%arg0: i32) -> (i32, i32) {
    %c0_i32 = arith.constant 0 : i32
    %c0_i32_0 = arith.constant 0 : i32
    %c0_i32_1 = arith.constant 0 : i32
    return %c0_i32, %c0_i32_0 : i32, i32
  }
  func.func @transform_7(%arg0: i32) -> (i32, i32) {
    %c0_i32 = arith.constant 0 : i32
    %c0_i32_0 = arith.constant 0 : i32
    return %arg0, %c0_i32 : i32, i32
  }
}

</mosaic_0001>

<llo_original>
// kernel: particle_encoder_forward.1
$region0: #{particle_encoder_forward.1}
  #allocation0 [shape = 'u32[]', space=smem, size = 0x4, offset = 0x4, fixed_abs, tag = 'smem constant byte address 0x4 - core index']
  #allocation1 [shape = 'u32[144,128]{1,0:T(1,128)}', space=vmem, size = 0x12000, scoped, tag = 'internal scratch']
  %s0 = inlined_call_operand.vmem [shape: f32[32,128], index: 0, kind: input, shape index: {}]
  %s1 = inlined_call_operand.vmem [shape: f32[128,128], index: 1, kind: input, shape index: {}]
  %s2 = inlined_call_operand.vmem [shape: f32[1,128], index: 2, kind: input, shape index: {}]
  %s3 = inlined_call_operand.vmem [shape: f32[128,128], index: 3, kind: input, shape index: {}]
  %s4 = inlined_call_operand.vmem [shape: f32[1,128], index: 4, kind: input, shape index: {}]
  %s5 = inlined_call_operand.vmem [shape: f32[128,128], index: 5, kind: input, shape index: {}]
  %s6 = inlined_call_operand.vmem [shape: f32[1,128], index: 6, kind: input, shape index: {}]
  %s7 = inlined_call_operand.hbm [shape: f32[32,128], index: 7, kind: output, shape index: {}]
  %s8 = sld [smem:[#allocation0]]
  $region61: #{particle_encoder_forward.1} parent=0
    _
  %s10 = ssub.s32 1, %s8
  %s11 = scalar_select 0, %s10, %s8
  $region1: #{particle_encoder_forward.1} parent=0
    #allocation2 [shape = 'u8[16384]{0}', space=vmem, size = 0x4000, scoped, tag = 'output window, operand 0']
    #allocation3 [shape = 's32[2]{0}', space=sflag, size = 0x8, scoped, tag = 'scoped memory for particle_encoder_forward.1']
    %12 = vsyncpa [#allocation3], 0
    %s13 = scalar_lea.sflag [#allocation3], 1
    %14 = vsyncpa %s13, 0
    loop: start=0, step=1, limit=4
    $region2: #{particle_encoder_forward.1} parent=1 // loop_pre_header
      _
    $region3: #{particle_encoder_forward.1} parent=1 // loop_header
      %s16 = sphi 0, %s20
      %p17 = scmp.ge.s32.totalorder %s16, 4
      %s26 = sphi 0, %s28
      %s29 = sphi 0, %s26
      %s30 = sphi 0, %s29
      %s46 = sphi 0, %s30
      %s50 = sphi 0, %s50
      %s52 = sphi 0, %s50
      %s53 = sphi 0, %s52
      %s67 = sphi 0, %s53
      %s71 = sphi 0, %s71
      %s73 = sphi 0, %s71
      %s74 = sphi 0, %s73
      %s88 = sphi 0, %s74
      %s92 = sphi 0, %s92
      %s94 = sphi 0, %s92
      %s95 = sphi 0, %s94
      %s109 = sphi 0, %s95
      %s113 = sphi 0, %s113
      %s115 = sphi 0, %s113
      %s116 = sphi 0, %s115
      %s130 = sphi 0, %s116
      %s134 = sphi 0, %s134
      %s136 = sphi 0, %s134
      %s137 = sphi 0, %s136
      %s151 = sphi 0, %s137
      %s155 = sphi 0, %s155
      %s157 = sphi 0, %s155
      %s158 = sphi 0, %s157
      %s172 = sphi 0, %s158
      %s178 = sphi 0, %s180
      %s181 = sphi 0, %s178
      %s182 = sphi 0, %s181
      %s198 = sphi 0, %s182
    $region4: #{particle_encoder_forward.1} parent=1 // loop_header_branch
      %19 = sbr.rel (%p17) target = $region8
    $region5: #{particle_encoder_forward.1} parent=1 // loop_body
      %s21 = ssub.s32 %s16, 1
      %s22 = ssub.s32 %s16, 2
      %s23 = sadd.s32 %s16, 1
      %s24 = ssub.s32 %s16, %s23
      %p25 = scmp.eq.s32.totalorder %s24, 0
      %s27 = sadd.s32 %s26, 1
      %s28 = scalar_select %p25, %s26, %s27
      %p31 = pneg %p25
      %p32 = scmp.eq.s32.totalorder %s16, 1
      %p33 = por %p31, %p32
      %p34 = scmp.ne.s32.totalorder %s26, %s29
      %p35 = scmp.eq.s32.totalorder %s16, 0
      %p36 = por %p34, %p35
      %p37 = scmp.ne.s32.totalorder %s26, %s29
      %p38 = scmp.eq.s32.totalorder %s21, 1
      %p39 = por %p37, %p38
      %p40 = scmp.ne.s32.totalorder %s29, %s30
      %p41 = scmp.eq.s32.totalorder %s21, 0
      %p42 = por %p40, %p41
      %p43 = scmp.ne.s32.totalorder %s29, %s30
      %p44 = scmp.eq.s32.totalorder %s22, 1
      %p45 = por %p43, %p44
      %p47 = scmp.ne.s32.totalorder %s30, %s46
      %p48 = scmp.eq.s32.totalorder %s22, 0
      %p49 = por %p47, %p48
      %s51 = sadd.s32 %s50, 1
      %p54 = scmp.eq.s32.totalorder %s16, 1
      %p55 = scmp.ne.s32.totalorder %s50, %s52
      %p56 = scmp.eq.s32.totalorder %s16, 0
      %p57 = por %p55, %p56
      %p58 = scmp.ne.s32.totalorder %s50, %s52
      %p59 = scmp.eq.s32.totalorder %s21, 1
      %p60 = por %p58, %p59
      %p61 = scmp.ne.s32.totalorder %s52, %s53
      %p62 = scmp.eq.s32.totalorder %s21, 0
      %p63 = por %p61, %p62
      %p64 = scmp.ne.s32.totalorder %s52, %s53
      %p65 = scmp.eq.s32.totalorder %s22, 1
      %p66 = por %p64, %p65
      %p68 = scmp.ne.s32.totalorder %s53, %s67
      %p69 = scmp.eq.s32.totalorder %s22, 0
      %p70 = por %p68, %p69
      %s72 = sadd.s32 %s71, 1
      %p75 = scmp.eq.s32.totalorder %s16, 1
      %p76 = scmp.ne.s32.totalorder %s71, %s73
      %p77 = scmp.eq.s32.totalorder %s16, 0
      %p78 = por %p76, %p77
      %p79 = scmp.ne.s32.totalorder %s71, %s73
      %p80 = scmp.eq.s32.totalorder %s21, 1
      %p81 = por %p79, %p80
      %p82 = scmp.ne.s32.totalorder %s73, %s74
      %p83 = scmp.eq.s32.totalorder %s21, 0
      %p84 = por %p82, %p83
      %p85 = scmp.ne.s32.totalorder %s73, %s74
      %p86 = scmp.eq.s32.totalorder %s22, 1
      %p87 = por %p85, %p86
      %p89 = scmp.ne.s32.totalorder %s74, %s88
      %p90 = scmp.eq.s32.totalorder %s22, 0
      %p91 = por %p89, %p90
      %s93 = sadd.s32 %s92, 1
      %p96 = scmp.eq.s32.totalorder %s16, 1
      %p97 = scmp.ne.s32.totalorder %s92, %s94
      %p98 = scmp.eq.s32.totalorder %s16, 0
      %p99 = por %p97, %p98
      %p100 = scmp.ne.s32.totalorder %s92, %s94
      %p101 = scmp.eq.s32.totalorder %s21, 1
      %p102 = por %p100, %p101
      %p103 = scmp.ne.s32.totalorder %s94, %s95
      %p104 = scmp.eq.s32.totalorder %s21, 0
      %p105 = por %p103, %p104
      %p106 = scmp.ne.s32.totalorder %s94, %s95
      %p107 = scmp.eq.s32.totalorder %s22, 1
      %p108 = por %p106, %p107
      %p110 = scmp.ne.s32.totalorder %s95, %s109
      %p111 = scmp.eq.s32.totalorder %s22, 0
      %p112 = por %p110, %p111
      %s114 = sadd.s32 %s113, 1
      %p117 = scmp.eq.s32.totalorder %s16, 1
      %p118 = scmp.ne.s32.totalorder %s113, %s115
      %p119 = scmp.eq.s32.totalorder %s16, 0
      %p120 = por %p118, %p119
      %p121 = scmp.ne.s32.totalorder %s113, %s115
      %p122 = scmp.eq.s32.totalorder %s21, 1
      %p123 = por %p121, %p122
      %p124 = scmp.ne.s32.totalorder %s115, %s116
      %p125 = scmp.eq.s32.totalorder %s21, 0
      %p126 = por %p124, %p125
      %p127 = scmp.ne.s32.totalorder %s115, %s116
      %p128 = scmp.eq.s32.totalorder %s22, 1
      %p129 = por %p127, %p128
      %p131 = scmp.ne.s32.totalorder %s116, %s130
      %p132 = scmp.eq.s32.totalorder %s22, 0
      %p133 = por %p131, %p132
      %s135 = sadd.s32 %s134, 1
      %p138 = scmp.eq.s32.totalorder %s16, 1
      %p139 = scmp.ne.s32.totalorder %s134, %s136
      %p140 = scmp.eq.s32.totalorder %s16, 0
      %p141 = por %p139, %p140
      %p142 = scmp.ne.s32.totalorder %s134, %s136
      %p143 = scmp.eq.s32.totalorder %s21, 1
      %p144 = por %p142, %p143
      %p145 = scmp.ne.s32.totalorder %s136, %s137
      %p146 = scmp.eq.s32.totalorder %s21, 0
      %p147 = por %p145, %p146
      %p148 = scmp.ne.s32.totalorder %s136, %s137
      %p149 = scmp.eq.s32.totalorder %s22, 1
      %p150 = por %p148, %p149
      %p152 = scmp.ne.s32.totalorder %s137, %s151
      %p153 = scmp.eq.s32.totalorder %s22, 0
      %p154 = por %p152, %p153
      %s156 = sadd.s32 %s155, 1
      %p159 = scmp.eq.s32.totalorder %s16, 1
      %p160 = scmp.ne.s32.totalorder %s155, %s157
      %p161 = scmp.eq.s32.totalorder %s16, 0
      %p162 = por %p160, %p161
      %p163 = scmp.ne.s32.totalorder %s155, %s157
      %p164 = scmp.eq.s32.totalorder %s21, 1
      %p165 = por %p163, %p164
      %p166 = scmp.ne.s32.totalorder %s157, %s158
      %p167 = scmp.eq.s32.totalorder %s21, 0
      %p168 = por %p166, %p167
      %p169 = scmp.ne.s32.totalorder %s157, %s158
      %p170 = scmp.eq.s32.totalorder %s22, 1
      %p171 = por %p169, %p170
      %p173 = scmp.ne.s32.totalorder %s158, %s172
      %p174 = scmp.eq.s32.totalorder %s22, 0
      %p175 = por %p173, %p174
      %s176 = ssub.s32 %s16, %s23
      %p177 = scmp.eq.s32.totalorder %s176, 0
      %s179 = sadd.s32 %s178, 1
      %s180 = scalar_select %p177, %s178, %s179
      %p183 = pneg %p177
      %p184 = scmp.eq.s32.totalorder %s16, 1
      %p185 = por %p183, %p184
      %p186 = scmp.ne.s32.totalorder %s178, %s181
      %p187 = scmp.eq.s32.totalorder %s16, 0
      %p188 = por %p186, %p187
      %p189 = scmp.ne.s32.totalorder %s178, %s181
      %p190 = scmp.eq.s32.totalorder %s21, 1
      %p191 = por %p189, %p190
      %p192 = scmp.ne.s32.totalorder %s181, %s182
      %p193 = scmp.eq.s32.totalorder %s21, 0
      %p194 = por %p192, %p193
      %p195 = scmp.ne.s32.totalorder %s181, %s182
      %p196 = scmp.eq.s32.totalorder %s22, 1
      %p197 = por %p195, %p196
      %p199 = scmp.ne.s32.totalorder %s182, %s198
      %p200 = scmp.eq.s32.totalorder %s22, 0
      %p201 = por %p199, %p200
      %p202 = scmp.le.s32.totalorder 1, %s16
      %p203 = scmp.lt.s32.totalorder %s16, 3
      %p204 = pnand %p202, %p203
      %p205 = pneg %p204
      // Predicated region
      $region9: #{particle_encoder_forward.1} parent=5 // pred_check
        _
      $region10: #{particle_encoder_forward.1} parent=5 // pred_check_branch
        %207 = sbr.rel (%p204) target = $region12
      $region11: #{particle_encoder_forward.1} parent=5 // pred_region
        %s208 = ssub.s32 %s16, 1
        // Predicated region
        $region13: #{particle_encoder_forward.1} parent=11 // pred_check
          %p209 = pneg %p63
        $region14: #{particle_encoder_forward.1} parent=11 // pred_check_branch
          %211 = sbr.rel (%p209) target = $region16
        $region15: #{particle_encoder_forward.1} parent=11 // pred_region
          _
        $region16: #{particle_encoder_forward.1} parent=11 // pred_fallthru
          _
        // Predicated region
        $region17: #{particle_encoder_forward.1} parent=11 // pred_check
          %p212 = pneg %p84
        $region18: #{particle_encoder_forward.1} parent=11 // pred_check_branch
          %214 = sbr.rel (%p212) target = $region20
        $region19: #{particle_encoder_forward.1} parent=11 // pred_region
          _
        $region20: #{particle_encoder_forward.1} parent=11 // pred_fallthru
          _
        // Predicated region
        $region21: #{particle_encoder_forward.1} parent=11 // pred_check
          %p215 = pneg %p105
        $region22: #{particle_encoder_forward.1} parent=11 // pred_check_branch
          %217 = sbr.rel (%p215) target = $region24
        $region23: #{particle_encoder_forward.1} parent=11 // pred_region
          _
        $region24: #{particle_encoder_forward.1} parent=11 // pred_fallthru
          _
        // Predicated region
        $region25: #{particle_encoder_forward.1} parent=11 // pred_check
          %p218 = pneg %p126
        $region26: #{particle_encoder_forward.1} parent=11 // pred_check_branch
          %220 = sbr.rel (%p218) target = $region28
        $region27: #{particle_encoder_forward.1} parent=11 // pred_region
          _
        $region28: #{particle_encoder_forward.1} parent=11 // pred_fallthru
          _
        // Predicated region
        $region29: #{particle_encoder_forward.1} parent=11 // pred_check
          %p221 = pneg %p147
        $region30: #{particle_encoder_forward.1} parent=11 // pred_check_branch
          %223 = sbr.rel (%p221) target = $region32
        $region31: #{particle_encoder_forward.1} parent=11 // pred_region
          _
        $region32: #{particle_encoder_forward.1} parent=11 // pred_fallthru
          _
        // Predicated region
        $region33: #{particle_encoder_forward.1} parent=11 // pred_check
          %p224 = pneg %p168
        $region34: #{particle_encoder_forward.1} parent=11 // pred_check_branch
          %226 = sbr.rel (%p224) target = $region36
        $region35: #{particle_encoder_forward.1} parent=11 // pred_region
          _
        $region36: #{particle_encoder_forward.1} parent=11 // pred_fallthru
          _
      $region12: #{particle_encoder_forward.1} parent=5 // pred_fallthru
        _
      %p227 = scmp.lt.s32.totalorder %s16, 2
      // Predicated region
      $region37: #{particle_encoder_forward.1} parent=5 // pred_check
        %p228 = pneg %p227
      $region38: #{particle_encoder_forward.1} parent=5 // pred_check_branch
        %230 = sbr.rel (%p228) target = $region40
      $region39: #{particle_encoder_forward.1} parent=5 // pred_region
        // Predicated region
        $region41: #{particle_encoder_forward.1} parent=39 // pred_check
          %p231 = pneg %p36
        $region42: #{particle_encoder_forward.1} parent=39 // pred_check_branch
          %233 = sbr.rel (%p231) target = $region44
        $region43: #{particle_encoder_forward.1} parent=39 // pred_region
          %s234 = smul.u32 2, %s16
          %p235 = scmp.lt.s32.totalorder %s234, 3
          %s236 = scalar_select %p235, %s234, 3
          %s237 = smul.addr %s236, 8
          %s238 = scalar_lea.vmem %s0, %s237
          %s239 = smul.u32 2, %s16
        $region44: #{particle_encoder_forward.1} parent=39 // pred_fallthru
          _
      $region40: #{particle_encoder_forward.1} parent=5 // pred_fallthru
        _
      %p240 = scmp.le.s32.totalorder 1, %s16
      %p241 = scmp.lt.s32.totalorder %s16, 3
      %p242 = pnand %p240, %p241
      %p243 = pneg %p242
      // Predicated region
      $region45: #{particle_encoder_forward.1} parent=5 // pred_check
        _
      $region46: #{particle_encoder_forward.1} parent=5 // pred_check_branch
        %245 = sbr.rel (%p242) target = $region48
      $region47: #{particle_encoder_forward.1} parent=5 // pred_region
        %s246 = ssub.s32 %s16, 1
        %s247 = smul.u32 2, %s21
        %p248 = scmp.lt.s32.totalorder %s247, 3
        %s249 = scalar_select %p248, %s247, 3
        %s250 = smul.addr %s249, 8
        %s251 = scalar_lea.vmem %s0, %s250
        %p252 = pneg %p42
        %p253 = pneg %p39
        %p254 = pneg %p63
        %p255 = pneg %p60
        %p256 = pneg %p84
        %p257 = pneg %p81
        %p258 = pneg %p105
        %p259 = pneg %p102
        %p260 = pneg %p126
        %p261 = pneg %p123
        %p262 = pneg %p147
        %p263 = pneg %p144
        %p264 = pneg %p168
        %p265 = pneg %p165
        %p266 = pneg %p194
        %p267 = pneg %p191
        %s268 = sand.u32 %s181, 1
        %s269 = scalar_lea.sflag [#allocation3], %s268
        %s270 = sand.u32 %s181, 1
        %s271 = smul.addr %s270, 16
        %s272 = scalar_lea.vmem [#allocation2], %s271
        %s273 = smul.u32 2, %s21
        %p274 = scmp.lt.s32.totalorder %s273, 3
        %s275 = scalar_select %p274, %s273, 3
        %s276 = smul.addr %s275, 8
        %s277 = scalar_lea.vmem %s0, %s276
        %s278 = smul.u32 2, %s21
        %s279 = smul.u32 2, %s21
        %v280 = vld [vmem:[%s277] sm:$0xff]
        %v281 = vld [vmem:[%s277 + $0x8] sm:$0xff]
        %v282 = vld [vmem:[%s1] sm:$0xff]
        %v283 = vld [vmem:[%s1 + $0x8] sm:$0xff]
        %v284 = vld [vmem:[%s1 + $0x10] sm:$0xff]
        %v285 = vld [vmem:[%s1 + $0x18] sm:$0xff]
        %v286 = vld [vmem:[%s1 + $0x20] sm:$0xff]
        %v287 = vld [vmem:[%s1 + $0x28] sm:$0xff]
        %v288 = vld [vmem:[%s1 + $0x30] sm:$0xff]
        %v289 = vld [vmem:[%s1 + $0x38] sm:$0xff]
        %v290 = vld [vmem:[%s1 + $0x40] sm:$0xff]
        %v291 = vld [vmem:[%s1 + $0x48] sm:$0xff]
        %v292 = vld [vmem:[%s1 + $0x50] sm:$0xff]
        %v293 = vld [vmem:[%s1 + $0x58] sm:$0xff]
        %v294 = vld [vmem:[%s1 + $0x60] sm:$0xff]
        %v295 = vld [vmem:[%s1 + $0x68] sm:$0xff]
        %v296 = vld [vmem:[%s1 + $0x70] sm:$0xff]
        %v297 = vld [vmem:[%s1 + $0x78] sm:$0xff]
        %v298 = vld [vmem:[%s2] sm:$0x1]
        %v300 = vlaneseq
        %v301 = vshrl.u32 %v300, 7
        %v302 = vsub.s32 0, %v301
        %v303 = vrot.slane %v298, %v302
        %305 = vmatprep.subr.mxu0 0.0
        %306 = vmatpush1.msra.mxu0 %v297
        %307 = vmatprep.subr.mxu0 0.0
        %308 = vmatpush1.msra.mxu0 %v296
        %309 = vmatprep.subr.mxu0 0.0
        %310 = vmatpush1.msra.mxu0 %v295
        %311 = vmatprep.subr.mxu0 0.0
        %312 = vmatpush1.msra.mxu0 %v294
        %313 = vmatprep.subr.mxu0 0.0
        %314 = vmatpush1.msra.mxu0 %v293
        %315 = vmatprep.subr.mxu0 0.0
        %316 = vmatpush1.msra.mxu0 %v292
        %317 = vmatprep.subr.mxu0 0.0
        %318 = vmatpush1.msra.mxu0 %v291
        %319 = vmatprep.subr.mxu0 0.0
        %320 = vmatpush1.msra.mxu0 %v290
        %321 = vmatprep.subr.mxu0 0.0
        %322 = vmatpush1.msra.mxu0 %v289
        %323 = vmatprep.subr.mxu0 0.0
        %324 = vmatpush1.msra.mxu0 %v288
        %325 = vmatprep.subr.mxu0 0.0
        %326 = vmatpush1.msra.mxu0 %v287
        %327 = vmatprep.subr.mxu0 0.0
        %328 = vmatpush1.msra.mxu0 %v286
        %329 = vmatprep.subr.mxu0 0.0
        %330 = vmatpush1.msra.mxu0 %v285
        %331 = vmatprep.subr.mxu0 0.0
        %332 = vmatpush1.msra.mxu0 %v284
        %333 = vmatprep.subr.mxu0 0.0
        %334 = vmatpush1.msra.mxu0 %v283
        %335 = vmatprep.subr.mxu0 0.0
        %336 = vmatpush1.msra.mxu0 %v282
        %337 = vmatprep.subr.mxu0 0.0
        %338 = vmatpush2.msra.mxu0 0.0
        %339 = vmatprep.subr.mxu0 0.0
        %340 = vmatpush2.msra.mxu0 0.0
        %341 = vmatprep.subr.mxu0 0.0
        %342 = vmatpush2.msra.mxu0 0.0
        %343 = vmatprep.subr.mxu0 0.0
        %344 = vmatpush2.msra.mxu0 0.0
        %345 = vmatprep.subr.mxu0 0.0
        %346 = vmatpush2.msra.mxu0 0.0
        %347 = vmatprep.subr.mxu0 0.0
        %348 = vmatpush2.msra.mxu0 0.0
        %349 = vmatprep.subr.mxu0 0.0
        %350 = vmatpush2.msra.mxu0 0.0
        %351 = vmatprep.subr.mxu0 0.0
        %352 = vmatpush2.msra.mxu0 0.0
        %353 = vmatprep.subr.mxu0 0.0
        %354 = vmatpush2.msra.mxu0 0.0
        %355 = vmatprep.subr.mxu0 0.0
        %356 = vmatpush2.msra.mxu0 0.0
        %357 = vmatprep.subr.mxu0 0.0
        %358 = vmatpush2.msra.mxu0 0.0
        %359 = vmatprep.subr.mxu0 0.0
        %360 = vmatpush2.msra.mxu0 0.0
        %361 = vmatprep.subr.mxu0 0.0
        %362 = vmatpush2.msra.mxu0 0.0
        %363 = vmatprep.subr.mxu0 0.0
        %364 = vmatpush2.msra.mxu0 0.0
        %365 = vmatprep.subr.mxu0 0.0
        %366 = vmatpush2.msra.mxu0 0.0
        %367 = vmatprep.subr.mxu0 0.0
        %368 = vmatpush2.msra.mxu0 0.0
        %369 = vmatprep.mubr.f32.mxu0 0.0
        %370 = vmatmul.mubr.f32.gmra.mxu0 %v280
        %v371 = vpop.f32.mrf.mxu0
        %v372 = vadd.f32 %v303, %v371
        %v373 = vpop.f32.mrf.mxu0
        %374 = vmatprep.mubr.f32.mxu0 0.0
        %375 = vmatmul.mubr.f32.gmra.mxu0 %v281
        %v376 = vpop.f32.mrf.mxu0
        %v377 = vadd.f32 %v303, %v376
        %v378 = vpop.f32.mrf.mxu0
        %379 = vdwg.mxu0
        %v380 = vmax.f32 %v372, 0.0
        %v381 = vmax.f32 %v377, 0.0
        %v382 = vld [vmem:[%s3] sm:$0xff]
        %v383 = vld [vmem:[%s3 + $0x8] sm:$0xff]
        %v384 = vld [vmem:[%s3 + $0x10] sm:$0xff]
        %v385 = vld [vmem:[%s3 + $0x18] sm:$0xff]
        %v386 = vld [vmem:[%s3 + $0x20] sm:$0xff]
        %v387 = vld [vmem:[%s3 + $0x28] sm:$0xff]
        %v388 = vld [vmem:[%s3 + $0x30] sm:$0xff]
        %v389 = vld [vmem:[%s3 + $0x38] sm:$0xff]
        %v390 = vld [vmem:[%s3 + $0x40] sm:$0xff]
        %v391 = vld [vmem:[%s3 + $0x48] sm:$0xff]
        %v392 = vld [vmem:[%s3 + $0x50] sm:$0xff]
        %v393 = vld [vmem:[%s3 + $0x58] sm:$0xff]
        %v394 = vld [vmem:[%s3 + $0x60] sm:$0xff]
        %v395 = vld [vmem:[%s3 + $0x68] sm:$0xff]
        %v396 = vld [vmem:[%s3 + $0x70] sm:$0xff]
        %v397 = vld [vmem:[%s3 + $0x78] sm:$0xff]
        %v398 = vld [vmem:[%s4] sm:$0x1]
        %v400 = vlaneseq
        %v401 = vshrl.u32 %v400, 7
        %v402 = vsub.s32 0, %v401
        %v403 = vrot.slane %v398, %v402
        %405 = vmatprep.subr.mxu0 0.0
        %406 = vmatpush1.msra.mxu0 %v397
        %407 = vmatprep.subr.mxu0 0.0
        %408 = vmatpush1.msra.mxu0 %v396
        %409 = vmatprep.subr.mxu0 0.0
        %410 = vmatpush1.msra.mxu0 %v395
        %411 = vmatprep.subr.mxu0 0.0
        %412 = vmatpush1.msra.mxu0 %v394
        %413 = vmatprep.subr.mxu0 0.0
        %414 = vmatpush1.msra.mxu0 %v393
        %415 = vmatprep.subr.mxu0 0.0
        %416 = vmatpush1.msra.mxu0 %v392
        %417 = vmatprep.subr.mxu0 0.0
        %418 = vmatpush1.msra.mxu0 %v391
        %419 = vmatprep.subr.mxu0 0.0
        %420 = vmatpush1.msra.mxu0 %v390
        %421 = vmatprep.subr.mxu0 0.0
        %422 = vmatpush1.msra.mxu0 %v389
        %423 = vmatprep.subr.mxu0 0.0
        %424 = vmatpush1.msra.mxu0 %v388
        %425 = vmatprep.subr.mxu0 0.0
        %426 = vmatpush1.msra.mxu0 %v387
        %427 = vmatprep.subr.mxu0 0.0
        %428 = vmatpush1.msra.mxu0 %v386
        %429 = vmatprep.subr.mxu0 0.0
        %430 = vmatpush1.msra.mxu0 %v385
        %431 = vmatprep.subr.mxu0 0.0
        %432 = vmatpush1.msra.mxu0 %v384
        %433 = vmatprep.subr.mxu0 0.0
        %434 = vmatpush1.msra.mxu0 %v383
        %435 = vmatprep.subr.mxu0 0.0
        %436 = vmatpush1.msra.mxu0 %v382
        %437 = vmatprep.subr.mxu0 0.0
        %438 = vmatpush2.msra.mxu0 0.0
        %439 = vmatprep.subr.mxu0 0.0
        %440 = vmatpush2.msra.mxu0 0.0
        %441 = vmatprep.subr.mxu0 0.0
        %442 = vmatpush2.msra.mxu0 0.0
        %443 = vmatprep.subr.mxu0 0.0
        %444 = vmatpush2.msra.mxu0 0.0
        %445 = vmatprep.subr.mxu0 0.0
        %446 = vmatpush2.msra.mxu0 0.0
        %447 = vmatprep.subr.mxu0 0.0
        %448 = vmatpush2.msra.mxu0 0.0
        %449 = vmatprep.subr.mxu0 0.0
        %450 = vmatpush2.msra.mxu0 0.0
        %451 = vmatprep.subr.mxu0 0.0
        %452 = vmatpush2.msra.mxu0 0.0
        %453 = vmatprep.subr.mxu0 0.0
        %454 = vmatpush2.msra.mxu0 0.0
        %455 = vmatprep.subr.mxu0 0.0
        %456 = vmatpush2.msra.mxu0 0.0
        %457 = vmatprep.subr.mxu0 0.0
        %458 = vmatpush2.msra.mxu0 0.0
        %459 = vmatprep.subr.mxu0 0.0
        %460 = vmatpush2.msra.mxu0 0.0
        %461 = vmatprep.subr.mxu0 0.0
        %462 = vmatpush2.msra.mxu0 0.0
        %463 = vmatprep.subr.mxu0 0.0
        %464 = vmatpush2.msra.mxu0 0.0
        %465 = vmatprep.subr.mxu0 0.0
        %466 = vmatpush2.msra.mxu0 0.0
        %467 = vmatprep.subr.mxu0 0.0
        %468 = vmatpush2.msra.mxu0 0.0
        %469 = vmatprep.mubr.f32.mxu0 0.0
        %470 = vmatmul.mubr.f32.gmra.mxu0 %v380
        %v471 = vpop.f32.mrf.mxu0
        %v472 = vadd.f32 %v403, %v471
        %v473 = vpop.f32.mrf.mxu0
        %474 = vmatprep.mubr.f32.mxu0 0.0
        %475 = vmatmul.mubr.f32.gmra.mxu0 %v381
        %v476 = vpop.f32.mrf.mxu0
        %v477 = vadd.f32 %v403, %v476
        %v478 = vpop.f32.mrf.mxu0
        %479 = vdwg.mxu0
        %v480 = vmax.f32 %v472, 0.0
        %v481 = vmax.f32 %v477, 0.0
        %v482 = vld [vmem:[%s5] sm:$0xff]
        %v483 = vld [vmem:[%s5 + $0x8] sm:$0xff]
        %v484 = vld [vmem:[%s5 + $0x10] sm:$0xff]
        %v485 = vld [vmem:[%s5 + $0x18] sm:$0xff]
        %v486 = vld [vmem:[%s5 + $0x20] sm:$0xff]
        %v487 = vld [vmem:[%s5 + $0x28] sm:$0xff]
        %v488 = vld [vmem:[%s5 + $0x30] sm:$0xff]
        %v489 = vld [vmem:[%s5 + $0x38] sm:$0xff]
        %v490 = vld [vmem:[%s5 + $0x40] sm:$0xff]
        %v491 = vld [vmem:[%s5 + $0x48] sm:$0xff]
        %v492 = vld [vmem:[%s5 + $0x50] sm:$0xff]
        %v493 = vld [vmem:[%s5 + $0x58] sm:$0xff]
        %v494 = vld [vmem:[%s5 + $0x60] sm:$0xff]
        %v495 = vld [vmem:[%s5 + $0x68] sm:$0xff]
        %v496 = vld [vmem:[%s5 + $0x70] sm:$0xff]
        %v497 = vld [vmem:[%s5 + $0x78] sm:$0xff]
        %v498 = vld [vmem:[%s6] sm:$0x1]
        %v500 = vlaneseq
        %v501 = vshrl.u32 %v500, 7
        %v502 = vsub.s32 0, %v501
        %v503 = vrot.slane %v498, %v502
        %505 = vmatprep.subr.mxu0 0.0
        %506 = vmatpush1.msra.mxu0 %v497
        %507 = vmatprep.subr.mxu0 0.0
        %508 = vmatpush1.msra.mxu0 %v496
        %509 = vmatprep.subr.mxu0 0.0
        %510 = vmatpush1.msra.mxu0 %v495
        %511 = vmatprep.subr.mxu0 0.0
        %512 = vmatpush1.msra.mxu0 %v494
        %513 = vmatprep.subr.mxu0 0.0
        %514 = vmatpush1.msra.mxu0 %v493
        %515 = vmatprep.subr.mxu0 0.0
        %516 = vmatpush1.msra.mxu0 %v492
        %517 = vmatprep.subr.mxu0 0.0
        %518 = vmatpush1.msra.mxu0 %v491
        %519 = vmatprep.subr.mxu0 0.0
        %520 = vmatpush1.msra.mxu0 %v490
        %521 = vmatprep.subr.mxu0 0.0
        %522 = vmatpush1.msra.mxu0 %v489
        %523 = vmatprep.subr.mxu0 0.0
        %524 = vmatpush1.msra.mxu0 %v488
        %525 = vmatprep.subr.mxu0 0.0
        %526 = vmatpush1.msra.mxu0 %v487
        %527 = vmatprep.subr.mxu0 0.0
        %528 = vmatpush1.msra.mxu0 %v486
        %529 = vmatprep.subr.mxu0 0.0
        %530 = vmatpush1.msra.mxu0 %v485
        %531 = vmatprep.subr.mxu0 0.0
        %532 = vmatpush1.msra.mxu0 %v484
        %533 = vmatprep.subr.mxu0 0.0
        %534 = vmatpush1.msra.mxu0 %v483
        %535 = vmatprep.subr.mxu0 0.0
        %536 = vmatpush1.msra.mxu0 %v482
        %537 = vmatprep.subr.mxu0 0.0
        %538 = vmatpush2.msra.mxu0 0.0
        %539 = vmatprep.subr.mxu0 0.0
        %540 = vmatpush2.msra.mxu0 0.0
        %541 = vmatprep.subr.mxu0 0.0
        %542 = vmatpush2.msra.mxu0 0.0
        %543 = vmatprep.subr.mxu0 0.0
        %544 = vmatpush2.msra.mxu0 0.0
        %545 = vmatprep.subr.mxu0 0.0
        %546 = vmatpush2.msra.mxu0 0.0
        %547 = vmatprep.subr.mxu0 0.0
        %548 = vmatpush2.msra.mxu0 0.0
        %549 = vmatprep.subr.mxu0 0.0
        %550 = vmatpush2.msra.mxu0 0.0
        %551 = vmatprep.subr.mxu0 0.0
        %552 = vmatpush2.msra.mxu0 0.0
        %553 = vmatprep.subr.mxu0 0.0
        %554 = vmatpush2.msra.mxu0 0.0
        %555 = vmatprep.subr.mxu0 0.0
        %556 = vmatpush2.msra.mxu0 0.0
        %557 = vmatprep.subr.mxu0 0.0
        %558 = vmatpush2.msra.mxu0 0.0
        %559 = vmatprep.subr.mxu0 0.0
        %560 = vmatpush2.msra.mxu0 0.0
        %561 = vmatprep.subr.mxu0 0.0
        %562 = vmatpush2.msra.mxu0 0.0
        %563 = vmatprep.subr.mxu0 0.0
        %564 = vmatpush2.msra.mxu0 0.0
        %565 = vmatprep.subr.mxu0 0.0
        %566 = vmatpush2.msra.mxu0 0.0
        %567 = vmatprep.subr.mxu0 0.0
        %568 = vmatpush2.msra.mxu0 0.0
        %569 = vmatprep.mubr.f32.mxu0 0.0
        %570 = vmatmul.mubr.f32.gmra.mxu0 %v480
        %v571 = vpop.f32.mrf.mxu0
        %v572 = vadd.f32 %v503, %v571
        %v573 = vpop.f32.mrf.mxu0
        %574 = vmatprep.mubr.f32.mxu0 0.0
        %575 = vmatmul.mubr.f32.gmra.mxu0 %v481
        %v576 = vpop.f32.mrf.mxu0
        %v577 = vadd.f32 %v503, %v576
        %v578 = vpop.f32.mrf.mxu0
        %579 = vdwg.mxu0
        %v580 = vmax.f32 %v572, 0.0
        %v581 = vmax.f32 %v577, 0.0
        %582 = vst [vmem:[%s272] sm:$0xff] %v580
        %583 = vst [vmem:[%s272 + $0x8] sm:$0xff] %v581
        %s584 = sand.u32 %s181, 1
        %s585 = scalar_lea.sflag [#allocation3], %s584
        %s586 = sand.u32 %s181, 1
        %s587 = smul.addr %s586, 16
        %s588 = scalar_lea.vmem [#allocation2], %s587
        // Predicated region
        $region49: #{particle_encoder_forward.1} parent=47 // pred_check
          %p589 = pneg %p191
        $region50: #{particle_encoder_forward.1} parent=47 // pred_check_branch
          %591 = sbr.rel (%p589) target = $region52
        $region51: #{particle_encoder_forward.1} parent=47 // pred_region
          %s592 = smul.u32 2, %s21
          %s594 = ssub.s32 256, 256
          %595 = vsyncadd %s585, %s594
          %s596 = smul.addr %s592, 128
          %s597 = scalar_lea.hbm %s7, %s596
          %s598 = sshll.u32 %s588, 4
          %s599 = int_to_ptr.vmem [resolvable:$true] %s598
          %604 = dma.vmem_to_hbm [thread:$0]  %s599, 256, %s597, %s585, 128, 128, 8
        $region52: #{particle_encoder_forward.1} parent=47 // pred_fallthru
          _
      $region48: #{particle_encoder_forward.1} parent=5 // pred_fallthru
        _
      %p605 = scmp.le.s32.totalorder 2, %s16
      // Predicated region
      $region53: #{particle_encoder_forward.1} parent=5 // pred_check
        %p606 = pneg %p605
      $region54: #{particle_encoder_forward.1} parent=5 // pred_check_branch
        %608 = sbr.rel (%p606) target = $region56
      $region55: #{particle_encoder_forward.1} parent=5 // pred_region
        %s609 = ssub.s32 %s16, 2
        // Predicated region
        $region57: #{particle_encoder_forward.1} parent=55 // pred_check
          %p610 = pneg %p197
        $region58: #{particle_encoder_forward.1} parent=55 // pred_check_branch
          %612 = sbr.rel (%p610) target = $region60
        $region59: #{particle_encoder_forward.1} parent=55 // pred_region
          %s613 = sand.u32 %s182, 1
          %s614 = scalar_lea.sflag [#allocation3], %s613
          %s615 = sand.u32 %s182, 1
          %s616 = smul.addr %s615, 16
          %s617 = scalar_lea.vmem [#allocation2], %s616
          %618 = dma.done %s614, 256
        $region60: #{particle_encoder_forward.1} parent=55 // pred_fallthru
          _
      $region56: #{particle_encoder_forward.1} parent=5 // pred_fallthru
        _
    $region6: #{particle_encoder_forward.1} parent=1 // loop_footer
      %s20 = sadd.s32 1, %s16
    $region7: #{particle_encoder_forward.1} parent=1 // loop_footer_branch
      %15 = sbr.rel target = $region3
    $region8: #{particle_encoder_forward.1} parent=1 // loop_exit
      _
    %619 = vsyncpa [#allocation3], 1
    %s620 = scalar_lea.sflag [#allocation3], 1
    %621 = vsyncpa %s620, 1

</llo_original>
